<compile_context>
chip_gen: v7x
topology: tpu7x:2x2x1
jax: 0.10.0
libtpu: 0.0.40
codegen_flags: <defaults>
</compile_context>

<pallas_src>
import functools

import numpy as np
import jax
import jax.numpy as jnp
from jax.experimental import pallas as pl
from jax.experimental.pallas import tpu as pltpu


# -----------------------------------------------------------------------------
# DMP radial-basis precompute (mirrors DMPParameters of the NDP dmp_layer:
# a_x = 1, a_z = 25, psi = exp(-h*(x-c)^2), c = exp(-a_x*linspace(0,1,N)),
# h = N^1.5 / c / a_x).  Korol passes T explicitly, so time_steps = T.
# TODO(synk): upstream Korol dmp_layer.py was not provided; this follows the
# canonical neural-dynamic-policies integrate() with time_steps = T.
# -----------------------------------------------------------------------------
def dmp_basis(N, T, dt, tau, a_x):
    """fb[t, n] = psi_t[n] * x_t / sum_n psi_t[n] for integration steps t=0..T-2."""
    n_steps = T - 1
    decay = 1.0 - a_x * dt / tau
    x_seq = decay ** np.arange(1, n_steps + 1)                       # canonical system x
    c = np.exp(-a_x * np.linspace(0.0, 1.0, N))                      # RBF centers
    h = np.ones(N) * (N ** 1.5) / c / a_x                            # RBF widths
    psi = np.exp(-h[None, :] * (x_seq[:, None] - c[None, :]) ** 2)   # (n_steps, N)
    fb = psi * x_seq[:, None] / psi.sum(axis=1, keepdims=True)
    return fb.astype(np.float32)


def _pack_slab(mats):
    """Pack 2-D matrices into one f32 slab; every region starts on an 8-row
    boundary so in-kernel static slices stay sublane-aligned."""
    width = max(m.shape[1] for m in mats)
    offs, row = [], 0
    for m in mats:
        start = (row + 7) // 8 * 8
        offs.append(start)
        row = start + m.shape[0]
    rows = (row + 7) // 8 * 8
    slab = np.zeros((rows, width), np.float32)
    for m, o in zip(mats, offs):
        slab[o:o + m.shape[0], :m.shape[1]] = np.asarray(m, np.float32)
    return slab, tuple(offs)


# -----------------------------------------------------------------------------
# Fused kernel: 2 hidden layers + one wide "rollout" matmul + one FMA.
# Column groups of the final matmul (width 3*T*k), precomputed at init:
#   LIN  [0      : T*k )  = alpha_t*y0 + gamma_t*goal + beta_t*z0   (affine part)
#   TRAJ [T*k    : 2T*k)  = sum_j D[t,j] * (w_{b,d} . fb_j)         (forcing rollout)
#   GD   [2T*k   : 3T*k)  = (goal - y0) tiled over t
# Output:  out[b, t*k+d] = TRAJ * GD + LIN   (exact affine DMP Euler rollout)
# -----------------------------------------------------------------------------
def _ndp_fused_kernel(xin_ref, slab_ref, out_ref, *, K, k, H, Tk, offs):
    r_w1, r_b1, r_w2, r_b2, r_w3h, r_b3, r_w3y = offs
    xin = xin_ref[...]                     # (bb, K + k)
    x = xin[:, :K]
    y0 = xin[:, K:K + k]

    w1 = slab_ref[r_w1:r_w1 + K, :H]
    b1 = slab_ref[r_b1:r_b1 + 1, :H]
    w2 = slab_ref[r_w2:r_w2 + H, :H]
    b2 = slab_ref[r_b2:r_b2 + 1, :H]
    w3h = slab_ref[r_w3h:r_w3h + H, :]     # (H, 3*Tk)
    b3 = slab_ref[r_b3:r_b3 + 1, :]        # (1, 3*Tk)
    w3y = slab_ref[r_w3y:r_w3y + k, :]     # (k, 3*Tk)

    h = jnp.maximum(jnp.dot(x, w1, preferred_element_type=jnp.float32) + b1, 0.0)
    h = jnp.maximum(jnp.dot(h, w2, preferred_element_type=jnp.float32) + b2, 0.0)
    big = (jnp.dot(h, w3h, preferred_element_type=jnp.float32)
           + jnp.dot(y0, w3y, preferred_element_type=jnp.float32)
           + b3)                           # (bb, 3*Tk)

    lin = big[:, :Tk]
    trajc = big[:, Tk:2 * Tk]
    gdt = big[:, 2 * Tk:3 * Tk]
    out_ref[...] = trajc * gdt + lin       # single lane-dense store of the trajectory


@functools.partial(jax.jit, static_argnames=("K", "k", "H", "T", "offs", "bb"))
def ndp_forward(xin, slab, *, K, k, H, T, offs, bb):
    B = xin.shape[0]
    Tk = T * k
    kernel = functools.partial(_ndp_fused_kernel, K=K, k=k, H=H, Tk=Tk, offs=offs)
    out = pl.pallas_call(
        kernel,
        grid=(pl.cdiv(B, bb),),
        in_specs=[pl.BlockSpec((bb, K + k), lambda i: (i, 0)),
                  pl.BlockSpec(slab.shape, lambda i: (0, 0))],
        out_specs=pl.BlockSpec((bb, Tk), lambda i: (i, 0)),
        out_shape=jax.ShapeDtypeStruct((B, Tk), jnp.float32),
        compiler_params=pltpu.CompilerParams(dimension_semantics=("parallel",)),
    )(xin, slab)
    # contiguous reshape (no transpose), fused into the same jit.
    return out.reshape(B, T, k)


# -----------------------------------------------------------------------------
# NdpCnn (Pallas)
# -----------------------------------------------------------------------------
class NdpCnnPallas:
    def __init__(self, key, layer_sizes=(4, 32, 32), state_index=np.arange(4),
                 N=5, T=10, l=10, b_init_value=0.1):
        assert len(layer_sizes) == 3
        self.N, self.T, self.l = N, T, l
        self.k = len(state_index)
        self.input_size = self.k
        # torch forward does x.view(-1, input_size) then Linear(layer_sizes[0], ...)
        assert self.input_size == layer_sizes[0]
        self.hidden = layer_sizes[-1]
        self.output_size = N * self.k + 2 * self.k
        self.tau, self.dt = 1.0, 0.01
        self.a_x, self.a_z = 1.0, 25.0
        self.b_z = self.a_z / 4.0
        z0 = 0.01 * self.tau                               # z0 = dy0 * tau, dy0 = 0.01

        fb_np = dmp_basis(N, T, self.dt, self.tau, self.a_x)          # (T-1, N)
        self.fb = jnp.asarray(fb_np)

        # ---- raw torch-equivalent parameters --------------------------------
        keys = jax.random.split(key, len(layer_sizes))
        sizes = list(layer_sizes)
        params = []
        for i in range(len(sizes) - 1):
            # fanin_init quirk: fan_in = weight.size(0) = out_features
            bound = 1.0 / np.sqrt(sizes[i + 1])
            w = jax.random.uniform(keys[i], (sizes[i + 1], sizes[i]),
                                   minval=-bound, maxval=bound, dtype=jnp.float32)
            b = jnp.full((1, sizes[i + 1]), b_init_value, jnp.float32)
            params.append((w.T, b))                                   # stored (in, out)
        w_last = jax.nn.initializers.orthogonal()(
            keys[-1], (self.output_size, sizes[-1]), jnp.float32)
        b_last = jnp.zeros((1, self.output_size), jnp.float32)
        params.append((w_last.T, b_last))
        (w1, b1), (w2, b2), (w3, b3) = params
        self.raw_params = (w1, b1, w2, b2, w3, b3)                    # for the reference

        # ---- fold x1000 scale + RBF basis + DMP transfer matrices -----------
        k, T1, Tk, H = self.k, T - 1, T * self.k, self.hidden
        w3s = np.asarray(w3, np.float64) * 1000.0                     # (H, out_size)
        b3s = np.asarray(b3, np.float64) * 1000.0                     # (1, out_size)
        fb64 = fb_np.astype(np.float64)

        # network output -> per-step forcing dot products  wdot[:, j*k+d]
        FB = np.zeros((self.output_size, T1 * k))
        for j in range(T1):
            for d in range(k):
                FB[k + d * N: k + (d + 1) * N, j * k + d] = fb64[j]

        # affine Euler rollout: s_{t+1} = A s_t + Bg*goal + Bf*fx_t ; y_t = e1.s_t
        h_ = self.dt / self.tau
        A = np.array([[1.0, h_], [-h_ * self.a_z * self.b_z, 1.0 - h_ * self.a_z]])
        Apow = [np.eye(2)]
        for _ in range(T - 1):
            Apow.append(Apow[-1] @ A)
        alpha = np.array([Apow[t][0, 0] for t in range(T)])           # coeff on y0
        betaz = np.array([Apow[t][0, 1] for t in range(T)])           # coeff on z0
        gamma = np.array([h_ * self.a_z * self.b_z *
                          sum(Apow[m][0, 1] for m in range(t)) for t in range(T)])
        D = np.zeros((T, T1))                                         # coeff on fx_j
        for t in range(T):
            for j in range(t):
                D[t, j] = h_ * Apow[t - 1 - j][0, 1]
        Rbig = np.zeros((T1 * k, Tk))                                 # fx dots -> trajectory
        for t in range(T):
            for j in range(t):
                Rbig[j * k:(j + 1) * k, t * k:(t + 1) * k] = np.eye(k) * D[t, j]

        Wg, bg = w3s[:, :k], b3s[:, :k]                               # goal columns
        cols = np.arange(Tk)
        t_of, d_of = cols // k, cols % k
        W3h = np.zeros((H, 3 * Tk))
        W3y = np.zeros((k, 3 * Tk))
        b3c = np.zeros((1, 3 * Tk))
        # LIN group: alpha_t*y0 + gamma_t*goal + betaz_t*z0
        W3h[:, :Tk] = Wg[:, d_of] * gamma[t_of][None, :]
        b3c[0, :Tk] = bg[0, d_of] * gamma[t_of] + betaz[t_of] * z0
        W3y[d_of, cols] = alpha[t_of]
        # TRAJ group: unscaled forcing-term rollout
        W3h[:, Tk:2 * Tk] = w3s @ FB @ Rbig
        b3c[:, Tk:2 * Tk] = b3s @ FB @ Rbig
        # GD group: (goal - y0) tiled over t
        W3h[:, 2 * Tk:] = Wg[:, d_of]
        b3c[0, 2 * Tk:] = bg[0, d_of]
        W3y[d_of, 2 * Tk + cols] = -1.0

        # ---- one packed weight slab (single weight DMA) ----------------------
        slab_np, self.offs = _pack_slab(
            [np.asarray(w1, np.float64), np.asarray(b1, np.float64),
             np.asarray(w2, np.float64), np.asarray(b2, np.float64),
             W3h, b3c, W3y])
        self.slab = jnp.asarray(slab_np)

    def __call__(self, x, y0):
        x2 = x.reshape(-1, self.input_size).astype(jnp.float32)
        B = x2.shape[0]
        y0f = y0.reshape(B, self.k).astype(jnp.float32)               # y0.reshape(-1,1)[:,0]
        xin = jnp.concatenate([x2, y0f], axis=1)                      # single data DMA
        return ndp_forward(xin, self.slab, K=self.input_size, k=self.k,
                           H=self.hidden, T=self.T, offs=self.offs,
                           bb=min(B, 128))                            # (B, T, k)


# -----------------------------------------------------------------------------
# Pure-JAX reference (original, unfolded math) for verification
# -----------------------------------------------------------------------------
def reference_forward(x, y0, model):
    w1, b1, w2, b2, w3, b3 = model.raw_params
    hp = jax.lax.Precision.HIGHEST
    h = jax.nn.relu(jnp.dot(x, w1, precision=hp) + b1)
    h = jax.nn.relu(jnp.dot(h, w2, precision=hp) + b2)
    out = (jnp.dot(h, w3, precision=hp) + b3) * 1000.0
    B, k, N, T = x.shape[0], model.k, model.N, model.T
    goal = out[:, :k].reshape(-1)
    w = out[:, k:k * (N + 1)].reshape(-1, N)
    y0f = y0.reshape(-1).astype(jnp.float32)
    dy0 = jnp.zeros_like(y0f) + 0.01
    y, z = y0f, dy0 * model.tau
    Y = [y0f]
    fb = model.fb
    for t in range(T - 1):
        fx = jnp.dot(w, fb[t], precision=hp) * (goal - y0f)
        dz = model.a_z * (model.b_z * (goal - y) - z) + fx
        dy = z
        dz = dz / model.tau
        dy = dy / model.tau
        y = y + dy * model.dt
        z = z + dz * model.dt
        Y.append(y)
    Yarr = jnp.stack(Y, axis=1)                                        # (B*k, T)
    return Yarr.reshape(B, k, T).transpose(0, 2, 1)                    # (B, T, k)


if __name__ == "__main__":
    key = jax.random.PRNGKey(0)
    k_model, k_x, k_y0 = jax.random.split(key, 3)

    B, K = 2, 4   # batch=2, n_dof (= input feature size) = 4
    model = NdpCnnPallas(k_model, layer_sizes=(K, 32, 32),
                         state_index=np.arange(K), N=5, T=10, l=10)

    x = jax.random.normal(k_x, (B, K), jnp.float32)
    y0 = jax.random.normal(k_y0, (B, K), jnp.float32) * 0.1

    y = model(x, y0)
    y = jax.block_until_ready(y)

    y_ref = reference_forward(x, y0, model)
    assert y.shape == (B, model.T, K), y.shape
    np.testing.assert_allclose(np.asarray(y), np.asarray(y_ref), rtol=1e-3, atol=1e-1)
    print("KERNEL_OK")
</pallas_src>

<mosaic_0001>
module attributes {stable_mosaic.version = 11 : i64} {
  func.func @_ndp_fused_kernel(%arg0: i32, %arg1: memref<2x8xf32, #tpu.memory_space<vmem>>, %arg2: memref<104x120xf32, #tpu.memory_space<vmem>>, %arg3: memref<2x40xf32, #tpu.memory_space<vmem>>) attributes {dimension_semantics = [#tpu.dimension_semantics<parallel>], iteration_bounds = array<i64: 1>, scalar_prefetch = 0 : i64, scratch_operands = 0 : i64, tpu.core_type = #tpu.core_type<tc>, window_params = [{transform_indices = @transform_0, window_bounds = array<i64: 2, 8>}, {pipeline_mode = #tpu.pipeline_mode<synchronous>, transform_indices = @transform_1, window_bounds = array<i64: 104, 120>}, {transform_indices = @transform_2, window_bounds = array<i64: 2, 40>}]} {
    %c0 = arith.constant 0 : index
    %c0_0 = arith.constant 0 : index
    %0 = vector.load %arg1[%c0, %c0_0] : memref<2x8xf32, #tpu.memory_space<vmem>>, vector<2x8xf32>
    %1 = vector.extract_strided_slice %0 {offsets = [0, 0], sizes = [2, 4], strides = [1, 1]} : vector<2x8xf32> to vector<2x4xf32>
    %2 = vector.extract_strided_slice %0 {offsets = [0, 4], sizes = [2, 4], strides = [1, 1]} : vector<2x8xf32> to vector<2x4xf32>
    %c0_1 = arith.constant 0 : index
    %c0_2 = arith.constant 0 : index
    %3 = vector.load %arg2[%c0_1, %c0_2] : memref<104x120xf32, #tpu.memory_space<vmem>>, vector<4x32xf32>
    %c8 = arith.constant 8 : index
    %c0_3 = arith.constant 0 : index
    %4 = vector.load %arg2[%c8, %c0_3] : memref<104x120xf32, #tpu.memory_space<vmem>>, vector<1x32xf32>
    %c16 = arith.constant 16 : index
    %c0_4 = arith.constant 0 : index
    %5 = vector.load %arg2[%c16, %c0_4] : memref<104x120xf32, #tpu.memory_space<vmem>>, vector<32x32xf32>
    %c48 = arith.constant 48 : index
    %c0_5 = arith.constant 0 : index
    %6 = vector.load %arg2[%c48, %c0_5] : memref<104x120xf32, #tpu.memory_space<vmem>>, vector<1x32xf32>
    %c56 = arith.constant 56 : index
    %c0_6 = arith.constant 0 : index
    %7 = vector.load %arg2[%c56, %c0_6] : memref<104x120xf32, #tpu.memory_space<vmem>>, vector<32x120xf32>
    %c88 = arith.constant 88 : index
    %c0_7 = arith.constant 0 : index
    %8 = vector.load %arg2[%c88, %c0_7] : memref<104x120xf32, #tpu.memory_space<vmem>>, vector<1x120xf32>
    %c96 = arith.constant 96 : index
    %c0_8 = arith.constant 0 : index
    %9 = vector.load %arg2[%c96, %c0_8] : memref<104x120xf32, #tpu.memory_space<vmem>>, vector<4x120xf32>
    %cst = arith.constant dense<0.000000e+00> : vector<2x32xf32>
    %10 = tpu.matmul %1, %3, %cst {dimension_numbers = #tpu.dot_dimension_numbers<[1], [0], [0], [1], [0, 0, 1, 1], [], []>} : vector<2x4xf32>, vector<4x32xf32>, vector<2x32xf32> -> vector<2x32xf32>
    %11 = vector.broadcast %4 : vector<1x32xf32> to vector<2x32xf32>
    %12 = arith.addf %10, %11 : vector<2x32xf32>
    %cst_9 = arith.constant 0.000000e+00 : f32
    %13 = vector.broadcast %cst_9 : f32 to vector<2x32xf32>
    %14 = arith.maximumf %12, %13 : vector<2x32xf32>
    %cst_10 = arith.constant dense<0.000000e+00> : vector<2x32xf32>
    %15 = tpu.matmul %14, %5, %cst_10 {dimension_numbers = #tpu.dot_dimension_numbers<[1], [0], [0], [1], [0, 0, 1, 1], [], []>} : vector<2x32xf32>, vector<32x32xf32>, vector<2x32xf32> -> vector<2x32xf32>
    %16 = vector.broadcast %6 : vector<1x32xf32> to vector<2x32xf32>
    %17 = arith.addf %15, %16 : vector<2x32xf32>
    %cst_11 = arith.constant 0.000000e+00 : f32
    %18 = vector.broadcast %cst_11 : f32 to vector<2x32xf32>
    %19 = arith.maximumf %17, %18 : vector<2x32xf32>
    %cst_12 = arith.constant dense<0.000000e+00> : vector<2x120xf32>
    %20 = tpu.matmul %19, %7, %cst_12 {dimension_numbers = #tpu.dot_dimension_numbers<[1], [0], [0], [1], [0, 0, 1, 1], [], []>} : vector<2x32xf32>, vector<32x120xf32>, vector<2x120xf32> -> vector<2x120xf32>
    %cst_13 = arith.constant dense<0.000000e+00> : vector<2x120xf32>
    %21 = tpu.matmul %2, %9, %cst_13 {dimension_numbers = #tpu.dot_dimension_numbers<[1], [0], [0], [1], [0, 0, 1, 1], [], []>} : vector<2x4xf32>, vector<4x120xf32>, vector<2x120xf32> -> vector<2x120xf32>
    %22 = arith.addf %20, %21 : vector<2x120xf32>
    %23 = vector.broadcast %8 : vector<1x120xf32> to vector<2x120xf32>
    %24 = arith.addf %22, %23 : vector<2x120xf32>
    %25 = vector.extract_strided_slice %24 {offsets = [0, 0], sizes = [2, 40], strides = [1, 1]} : vector<2x120xf32> to vector<2x40xf32>
    %26 = vector.extract_strided_slice %24 {offsets = [0, 40], sizes = [2, 40], strides = [1, 1]} : vector<2x120xf32> to vector<2x40xf32>
    %27 = vector.extract_strided_slice %24 {offsets = [0, 80], sizes = [2, 40], strides = [1, 1]} : vector<2x120xf32> to vector<2x40xf32>
    %28 = arith.mulf %26, %27 : vector<2x40xf32>
    %29 = arith.addf %28, %25 : vector<2x40xf32>
    %c0_14 = arith.constant 0 : index
    %c0_15 = arith.constant 0 : index
    %30 = vector.load %arg3[%c0_14, %c0_15] : memref<2x40xf32, #tpu.memory_space<vmem>>, vector<2x40xf32>
    tpu.vector_store %arg3[%c0_14, %c0_15], %29 {strides = array<i32>} : memref<2x40xf32, #tpu.memory_space<vmem>>, vector<2x40xf32>,
    return
  }
  func.func @transform_0(%arg0: i32) -> (i32, i32) {
    %c0_i32 = arith.constant 0 : i32
    %c0_i32_0 = arith.constant 0 : i32
    return %arg0, %c0_i32 : i32, i32
  }
  func.func @transform_1(%arg0: i32) -> (i32, i32) {
    %c0_i32 = arith.constant 0 : i32
    %c0_i32_0 = arith.constant 0 : i32
    %c0_i32_1 = arith.constant 0 : i32
    return %c0_i32, %c0_i32_0 : i32, i32
  }
  func.func @transform_2(%arg0: i32) -> (i32, i32) {
    %c0_i32 = arith.constant 0 : i32
    %c0_i32_0 = arith.constant 0 : i32
    return %arg0, %c0_i32 : i32, i32
  }
}

</mosaic_0001>

<llo_original>
// kernel: ndp_forward.1
$region0: #{ndp_forward.1}
  #allocation0 [shape = 'u32[]', space=smem, size = 0x4, offset = 0x4, fixed_abs, tag = 'smem constant byte address 0x4 - core index']
  #allocation1 [shape = 'u32[144,128]{1,0:T(1,128)}', space=vmem, size = 0x12000, scoped, tag = 'internal scratch']
  %s0 = inlined_call_operand.hbm [shape: f32[2,8], index: 0, kind: input, shape index: {}]
  %s1 = inlined_call_operand.hbm [shape: f32[104,120], index: 1, kind: input, shape index: {}]
  %s2 = inlined_call_operand.vmem [shape: f32[2,40], index: 2, kind: output, shape index: {}]
  %s3 = sld [smem:[#allocation0]]
  $region26: #{ndp_forward.1} parent=0
    _
  %s5 = ssub.s32 1, %s3
  %s6 = scalar_select 0, %s5, %s3
  $region1: #{ndp_forward.1} parent=0
    #allocation2 [shape = 'u8[1024]{0}', space=vmem, size = 0x400, scoped, tag = 'input window, operand 0, single buffered']
    #allocation3 [shape = 's32[1]{0}', space=sflag, size = 0x4, scoped, tag = 'scoped memory for ndp_forward.1']
    #allocation4 [shape = 'u8[53248]{0}', space=vmem, size = 0xd000, scoped, tag = 'input window, operand 1, single buffered']
    #allocation5 [shape = 's32[1]{0}', space=sflag, size = 0x4, scoped, tag = 'scoped memory for ndp_forward.1']
    %7 = vsyncpa [#allocation3], 0
    %8 = vsyncpa [#allocation5], 0
    // Predicated region
    $region2: #{ndp_forward.1} parent=1 // pred_check
      _
    $region3: #{ndp_forward.1} parent=1 // pred_check_branch
      %10 = sbr.rel (0) target = $region5
    $region4: #{ndp_forward.1} parent=1 // pred_region
      %s12 = ssub.s32 32, 32
      %13 = vsyncadd [#allocation3], %s12
      %s15 = sshll.u32 [#allocation2], 4
      %s16 = int_to_ptr.vmem [resolvable:$true] %s15
      %18 = dma.hbm_to_vmem [thread:$0]  %s0, 32, %s16, [#allocation3]
    $region5: #{ndp_forward.1} parent=1 // pred_fallthru
      _
    // Predicated region
    $region6: #{ndp_forward.1} parent=1 // pred_check
      _
    $region7: #{ndp_forward.1} parent=1 // pred_check_branch
      %20 = sbr.rel (0) target = $region9
    $region8: #{ndp_forward.1} parent=1 // pred_region
      %s22 = ssub.s32 1664, 1664
      %23 = vsyncadd [#allocation5], %s22
      %s24 = sshll.u32 [#allocation4], 4
      %s25 = int_to_ptr.vmem [resolvable:$true] %s24
      %30 = dma.hbm_to_vmem [thread:$0]  %s1, 1664, %s25, [#allocation5], 128, 128, 8
    $region9: #{ndp_forward.1} parent=1 // pred_fallthru
      _
    // Predicated region
    $region10: #{ndp_forward.1} parent=1 // pred_check
      _
    $region11: #{ndp_forward.1} parent=1 // pred_check_branch
      %32 = sbr.rel (0) target = $region13
    $region12: #{ndp_forward.1} parent=1 // pred_region
      %33 = dma.done [#allocation3], 32
    $region13: #{ndp_forward.1} parent=1 // pred_fallthru
      _
    // Predicated region
    $region14: #{ndp_forward.1} parent=1 // pred_check
      _
    $region15: #{ndp_forward.1} parent=1 // pred_check_branch
      %35 = sbr.rel (0) target = $region17
    $region16: #{ndp_forward.1} parent=1 // pred_region
      %36 = dma.done [#allocation5], 1664
    $region17: #{ndp_forward.1} parent=1 // pred_fallthru
      _
    %v37 = vld [vmem:[#allocation2] sm:$0x3]
    %v38 = vld [vmem:[#allocation4] sm:$0xf]
    %v39 = vld [vmem:[#allocation4 + $0x8] sm:$0x1]
    %v40 = vld [vmem:[#allocation4 + $0x10] sm:$0xff]
    %v41 = vld [vmem:[#allocation4 + $0x18] sm:$0xff]
    %v42 = vld [vmem:[#allocation4 + $0x20] sm:$0xff]
    %v43 = vld [vmem:[#allocation4 + $0x28] sm:$0xff]
    %v44 = vld [vmem:[#allocation4 + $0x30] sm:$0x1]
    %v45 = vld [vmem:[#allocation4 + $0x38] sm:$0xff]
    %v46 = vld [vmem:[#allocation4 + $0x40] sm:$0xff]
    %v47 = vld [vmem:[#allocation4 + $0x48] sm:$0xff]
    %v48 = vld [vmem:[#allocation4 + $0x50] sm:$0xff]
    %v49 = vld [vmem:[#allocation4 + $0x58] sm:$0x1]
    %v50 = vld [vmem:[#allocation4 + $0x60] sm:$0xf]
    %v51 = vlaneseq
    %v52 = vshrl.u32 %v51, 7
    %v53 = vsub.s32 0, %v52
    %v54 = vrot.slane %v39, %v53
    %vm55 = vcmask 31744
    %v57 = vsel %vm55, %v37, 0
    %vm59 = vcmask 1043456
    %v61 = vsel %vm59, %v38, 0
    %63 = vmatprep.subr.mxu0 0.0
    %64 = vmatpush1.msra.mxu0 %v61
    %65 = vmatprep.subr.mxu0 0.0
    %66 = vmatpush1.msra.mxu0 0.0
    %67 = vmatprep.subr.mxu0 0.0
    %68 = vmatpush1.msra.mxu0 0.0
    %69 = vmatprep.subr.mxu0 0.0
    %70 = vmatpush1.msra.mxu0 0.0
    %71 = vmatprep.subr.mxu0 0.0
    %72 = vmatpush1.msra.mxu0 0.0
    %73 = vmatprep.subr.mxu0 0.0
    %74 = vmatpush1.msra.mxu0 0.0
    %75 = vmatprep.subr.mxu0 0.0
    %76 = vmatpush1.msra.mxu0 0.0
    %77 = vmatprep.subr.mxu0 0.0
    %78 = vmatpush1.msra.mxu0 0.0
    %79 = vmatprep.subr.mxu0 0.0
    %80 = vmatpush1.msra.mxu0 0.0
    %81 = vmatprep.subr.mxu0 0.0
    %82 = vmatpush1.msra.mxu0 0.0
    %83 = vmatprep.subr.mxu0 0.0
    %84 = vmatpush1.msra.mxu0 0.0
    %85 = vmatprep.subr.mxu0 0.0
    %86 = vmatpush1.msra.mxu0 0.0
    %87 = vmatprep.subr.mxu0 0.0
    %88 = vmatpush1.msra.mxu0 0.0
    %89 = vmatprep.subr.mxu0 0.0
    %90 = vmatpush1.msra.mxu0 0.0
    %91 = vmatprep.subr.mxu0 0.0
    %92 = vmatpush1.msra.mxu0 0.0
    %93 = vmatprep.subr.mxu0 0.0
    %94 = vmatpush1.msra.mxu0 0.0
    %95 = vmatprep.subr.mxu0 0.0
    %96 = vmatpush1.msra.mxu0 0.0
    %97 = vmatprep.subr.mxu0 0.0
    %98 = vmatpush1.msra.mxu0 0.0
    %99 = vmatprep.subr.mxu0 0.0
    %100 = vmatpush1.msra.mxu0 0.0
    %101 = vmatprep.subr.mxu0 0.0
    %102 = vmatpush1.msra.mxu0 0.0
    %103 = vmatprep.subr.mxu0 0.0
    %104 = vmatpush1.msra.mxu0 0.0
    %105 = vmatprep.subr.mxu0 0.0
    %106 = vmatpush1.msra.mxu0 0.0
    %107 = vmatprep.subr.mxu0 0.0
    %108 = vmatpush1.msra.mxu0 0.0
    %109 = vmatprep.subr.mxu0 0.0
    %110 = vmatpush1.msra.mxu0 0.0
    %111 = vmatprep.subr.mxu0 0.0
    %112 = vmatpush1.msra.mxu0 0.0
    %113 = vmatprep.subr.mxu0 0.0
    %114 = vmatpush1.msra.mxu0 0.0
    %115 = vmatprep.subr.mxu0 0.0
    %116 = vmatpush1.msra.mxu0 0.0
    %117 = vmatprep.subr.mxu0 0.0
    %118 = vmatpush1.msra.mxu0 0.0
    %119 = vmatprep.subr.mxu0 0.0
    %120 = vmatpush1.msra.mxu0 0.0
    %121 = vmatprep.subr.mxu0 0.0
    %122 = vmatpush1.msra.mxu0 0.0
    %123 = vmatprep.subr.mxu0 0.0
    %124 = vmatpush1.msra.mxu0 0.0
    %125 = vmatprep.subr.mxu0 0.0
    %126 = vmatpush1.msra.mxu0 0.0
    %127 = vmatprep.mubr.f32.mxu0 0.0
    %128 = vmatmul.mubr.f32.gmra.mrb[0].mxu0 %v57
    %v129 = vpop.f32.mrb[0].mxu0
    %v130 = vadd.f32 %v54, %v129
    %v131 = vpop.f32.mrb[0].mxu0
    %132 = vdwg.mxu0
    %v133 = vmax.f32 %v130, 0.0
    %v134 = vlaneseq
    %v135 = vshrl.u32 %v134, 7
    %v136 = vsub.s32 0, %v135
    %v137 = vrot.slane %v44, %v136
    %vm138 = vcmask 261120
    %v140 = vsel %vm138, %v133, 0
    %142 = vmatprep.subr.mxu0 0.0
    %143 = vmatpush1.msra.mxu0 %v40
    %144 = vmatprep.subr.mxu0 0.0
    %145 = vmatpush1.msra.mxu0 %v41
    %146 = vmatprep.subr.mxu0 0.0
    %147 = vmatpush1.msra.mxu0 %v42
    %148 = vmatprep.subr.mxu0 0.0
    %149 = vmatpush1.msra.mxu0 %v43
    %150 = vmatprep.subr.mxu0 0.0
    %151 = vmatpush1.msra.mxu0 0.0
    %152 = vmatprep.subr.mxu0 0.0
    %153 = vmatpush1.msra.mxu0 0.0
    %154 = vmatprep.subr.mxu0 0.0
    %155 = vmatpush1.msra.mxu0 0.0
    %156 = vmatprep.subr.mxu0 0.0
    %157 = vmatpush1.msra.mxu0 0.0
    %158 = vmatprep.subr.mxu0 0.0
    %159 = vmatpush1.msra.mxu0 0.0
    %160 = vmatprep.subr.mxu0 0.0
    %161 = vmatpush1.msra.mxu0 0.0
    %162 = vmatprep.subr.mxu0 0.0
    %163 = vmatpush1.msra.mxu0 0.0
    %164 = vmatprep.subr.mxu0 0.0
    %165 = vmatpush1.msra.mxu0 0.0
    %166 = vmatprep.subr.mxu0 0.0
    %167 = vmatpush1.msra.mxu0 0.0
    %168 = vmatprep.subr.mxu0 0.0
    %169 = vmatpush1.msra.mxu0 0.0
    %170 = vmatprep.subr.mxu0 0.0
    %171 = vmatpush1.msra.mxu0 0.0
    %172 = vmatprep.subr.mxu0 0.0
    %173 = vmatpush1.msra.mxu0 0.0
    %174 = vmatprep.subr.mxu0 0.0
    %175 = vmatpush1.msra.mxu0 0.0
    %176 = vmatprep.subr.mxu0 0.0
    %177 = vmatpush1.msra.mxu0 0.0
    %178 = vmatprep.subr.mxu0 0.0
    %179 = vmatpush1.msra.mxu0 0.0
    %180 = vmatprep.subr.mxu0 0.0
    %181 = vmatpush1.msra.mxu0 0.0
    %182 = vmatprep.subr.mxu0 0.0
    %183 = vmatpush1.msra.mxu0 0.0
    %184 = vmatprep.subr.mxu0 0.0
    %185 = vmatpush1.msra.mxu0 0.0
    %186 = vmatprep.subr.mxu0 0.0
    %187 = vmatpush1.msra.mxu0 0.0
    %188 = vmatprep.subr.mxu0 0.0
    %189 = vmatpush1.msra.mxu0 0.0
    %190 = vmatprep.subr.mxu0 0.0
    %191 = vmatpush1.msra.mxu0 0.0
    %192 = vmatprep.subr.mxu0 0.0
    %193 = vmatpush1.msra.mxu0 0.0
    %194 = vmatprep.subr.mxu0 0.0
    %195 = vmatpush1.msra.mxu0 0.0
    %196 = vmatprep.subr.mxu0 0.0
    %197 = vmatpush1.msra.mxu0 0.0
    %198 = vmatprep.subr.mxu0 0.0
    %199 = vmatpush1.msra.mxu0 0.0
    %200 = vmatprep.subr.mxu0 0.0
    %201 = vmatpush1.msra.mxu0 0.0
    %202 = vmatprep.subr.mxu0 0.0
    %203 = vmatpush1.msra.mxu0 0.0
    %204 = vmatprep.subr.mxu0 0.0
    %205 = vmatpush1.msra.mxu0 0.0
    %206 = vmatprep.mubr.f32.mxu0 0.0
    %207 = vmatmul.mubr.f32.gmra.mrb[0].mxu0 %v140
    %v208 = vpop.f32.mrb[0].mxu0
    %v209 = vadd.f32 %v137, %v208
    %v210 = vpop.f32.mrb[0].mxu0
    %211 = vdwg.mxu0
    %v212 = vmax.f32 %v209, 0.0
    %213 = vrot.lane.b32.xlu0 %v37, 124
    %v214 = vpop.permute.xlu0 %213
    %v215 = vsel %vm55, %v214, 0
    %v218 = vsel %vm59, %v50, 0
    %220 = vmatprep.subr.mxu0 0.0
    %221 = vmatpush1.msra.mxu0 %v218
    %222 = vmatprep.subr.mxu0 0.0
    %223 = vmatpush1.msra.mxu0 0.0
    %224 = vmatprep.subr.mxu0 0.0
    %225 = vmatpush1.msra.mxu0 0.0
    %226 = vmatprep.subr.mxu0 0.0
    %227 = vmatpush1.msra.mxu0 0.0
    %228 = vmatprep.subr.mxu0 0.0
    %229 = vmatpush1.msra.mxu0 0.0
    %230 = vmatprep.subr.mxu0 0.0
    %231 = vmatpush1.msra.mxu0 0.0
    %232 = vmatprep.subr.mxu0 0.0
    %233 = vmatpush1.msra.mxu0 0.0
    %234 = vmatprep.subr.mxu0 0.0
    %235 = vmatpush1.msra.mxu0 0.0
    %236 = vmatprep.subr.mxu0 0.0
    %237 = vmatpush1.msra.mxu0 0.0
    %238 = vmatprep.subr.mxu0 0.0
    %239 = vmatpush1.msra.mxu0 0.0
    %240 = vmatprep.subr.mxu0 0.0
    %241 = vmatpush1.msra.mxu0 0.0
    %242 = vmatprep.subr.mxu0 0.0
    %243 = vmatpush1.msra.mxu0 0.0
    %244 = vmatprep.subr.mxu0 0.0
    %245 = vmatpush1.msra.mxu0 0.0
    %246 = vmatprep.subr.mxu0 0.0
    %247 = vmatpush1.msra.mxu0 0.0
    %248 = vmatprep.subr.mxu0 0.0
    %249 = vmatpush1.msra.mxu0 0.0
    %250 = vmatprep.subr.mxu0 0.0
    %251 = vmatpush1.msra.mxu0 0.0
    %252 = vmatprep.subr.mxu0 0.0
    %253 = vmatpush1.msra.mxu0 0.0
    %254 = vmatprep.subr.mxu0 0.0
    %255 = vmatpush1.msra.mxu0 0.0
    %256 = vmatprep.subr.mxu0 0.0
    %257 = vmatpush1.msra.mxu0 0.0
    %258 = vmatprep.subr.mxu0 0.0
    %259 = vmatpush1.msra.mxu0 0.0
    %260 = vmatprep.subr.mxu0 0.0
    %261 = vmatpush1.msra.mxu0 0.0
    %262 = vmatprep.subr.mxu0 0.0
    %263 = vmatpush1.msra.mxu0 0.0
    %264 = vmatprep.subr.mxu0 0.0
    %265 = vmatpush1.msra.mxu0 0.0
    %266 = vmatprep.subr.mxu0 0.0
    %267 = vmatpush1.msra.mxu0 0.0
    %268 = vmatprep.subr.mxu0 0.0
    %269 = vmatpush1.msra.mxu0 0.0
    %270 = vmatprep.subr.mxu0 0.0
    %271 = vmatpush1.msra.mxu0 0.0
    %272 = vmatprep.subr.mxu0 0.0
    %273 = vmatpush1.msra.mxu0 0.0
    %274 = vmatprep.subr.mxu0 0.0
    %275 = vmatpush1.msra.mxu0 0.0
    %276 = vmatprep.subr.mxu0 0.0
    %277 = vmatpush1.msra.mxu0 0.0
    %278 = vmatprep.subr.mxu0 0.0
    %279 = vmatpush1.msra.mxu0 0.0
    %280 = vmatprep.subr.mxu0 0.0
    %281 = vmatpush1.msra.mxu0 0.0
    %282 = vmatprep.subr.mxu0 0.0
    %283 = vmatpush1.msra.mxu0 0.0
    %284 = vmatprep.mubr.f32.mxu0 0.0
    %285 = vmatmul.mubr.f32.gmra.mrb[0].mxu0 %v215
    %v286 = vpop.f32.mrb[0].mxu0
    %v287 = vadd.f32 0.0, %v286
    %v288 = vpop.f32.mrb[0].mxu0
    %289 = vdwg.mxu0
    %v291 = vsel %vm138, %v212, 0
    %293 = vmatprep.subr.mxu0 0.0
    %294 = vmatpush1.msra.mxu0 %v45
    %295 = vmatprep.subr.mxu0 0.0
    %296 = vmatpush1.msra.mxu0 %v46
    %297 = vmatprep.subr.mxu0 0.0
    %298 = vmatpush1.msra.mxu0 %v47
    %299 = vmatprep.subr.mxu0 0.0
    %300 = vmatpush1.msra.mxu0 %v48
    %301 = vmatprep.subr.mxu0 0.0
    %302 = vmatpush1.msra.mxu0 0.0
    %303 = vmatprep.subr.mxu0 0.0
    %304 = vmatpush1.msra.mxu0 0.0
    %305 = vmatprep.subr.mxu0 0.0
    %306 = vmatpush1.msra.mxu0 0.0
    %307 = vmatprep.subr.mxu0 0.0
    %308 = vmatpush1.msra.mxu0 0.0
    %309 = vmatprep.subr.mxu0 0.0
    %310 = vmatpush1.msra.mxu0 0.0
    %311 = vmatprep.subr.mxu0 0.0
    %312 = vmatpush1.msra.mxu0 0.0
    %313 = vmatprep.subr.mxu0 0.0
    %314 = vmatpush1.msra.mxu0 0.0
    %315 = vmatprep.subr.mxu0 0.0
    %316 = vmatpush1.msra.mxu0 0.0
    %317 = vmatprep.subr.mxu0 0.0
    %318 = vmatpush1.msra.mxu0 0.0
    %319 = vmatprep.subr.mxu0 0.0
    %320 = vmatpush1.msra.mxu0 0.0
    %321 = vmatprep.subr.mxu0 0.0
    %322 = vmatpush1.msra.mxu0 0.0
    %323 = vmatprep.subr.mxu0 0.0
    %324 = vmatpush1.msra.mxu0 0.0
    %325 = vmatprep.subr.mxu0 0.0
    %326 = vmatpush1.msra.mxu0 0.0
    %327 = vmatprep.subr.mxu0 0.0
    %328 = vmatpush1.msra.mxu0 0.0
    %329 = vmatprep.subr.mxu0 0.0
    %330 = vmatpush1.msra.mxu0 0.0
    %331 = vmatprep.subr.mxu0 0.0
    %332 = vmatpush1.msra.mxu0 0.0
    %333 = vmatprep.subr.mxu0 0.0
    %334 = vmatpush1.msra.mxu0 0.0
    %335 = vmatprep.subr.mxu0 0.0
    %336 = vmatpush1.msra.mxu0 0.0
    %337 = vmatprep.subr.mxu0 0.0
    %338 = vmatpush1.msra.mxu0 0.0
    %339 = vmatprep.subr.mxu0 0.0
    %340 = vmatpush1.msra.mxu0 0.0
    %341 = vmatprep.subr.mxu0 0.0
    %342 = vmatpush1.msra.mxu0 0.0
    %343 = vmatprep.subr.mxu0 0.0
    %344 = vmatpush1.msra.mxu0 0.0
    %345 = vmatprep.subr.mxu0 0.0
    %346 = vmatpush1.msra.mxu0 0.0
    %347 = vmatprep.subr.mxu0 0.0
    %348 = vmatpush1.msra.mxu0 0.0
    %349 = vmatprep.subr.mxu0 0.0
    %350 = vmatpush1.msra.mxu0 0.0
    %351 = vmatprep.subr.mxu0 0.0
    %352 = vmatpush1.msra.mxu0 0.0
    %353 = vmatprep.subr.mxu0 0.0
    %354 = vmatpush1.msra.mxu0 0.0
    %355 = vmatprep.subr.mxu0 0.0
    %356 = vmatpush1.msra.mxu0 0.0
    %357 = vmatprep.mubr.f32.mxu0 0.0
    %358 = vmatmul.mubr.f32.gmra.mrb[0].mxu0 %v291
    %v359 = vpop.f32.mrb[0].mxu0
    %v360 = vadd.f32 %v287, %v359
    %v361 = vpop.f32.mrb[0].mxu0
    %362 = vdwg.mxu0
    %v363 = vlaneseq
    %v364 = vshrl.u32 %v363, 7
    %v365 = vsub.s32 0, %v364
    %v366 = vrot.slane %v49, %v365
    %v367 = vadd.f32 %v360, %v366
    %369 = vrot.lane.b32.xlu0 %v367, 88
    %v370 = vpop.permute.xlu0 %369
    %v372 = vmul.f32 %v367, %v370
    %373 = vrot.lane.b32.xlu0 %v367, 40
    %v374 = vpop.permute.xlu0 %373
    %v376 = vadd.f32 %v372, %v374
    %378 = vrot.lane.b32.xlu0 %v376, 88
    %v379 = vpop.permute.xlu0 %378
    %vm381 = vcmask 320512
    %382 = vst.msk [vmem:[%s2] sm:$0x3] %vm381, %v379
    // Predicated region
    $region18: #{ndp_forward.1} parent=1 // pred_check
      _
    $region19: #{ndp_forward.1} parent=1 // pred_check_branch
      %384 = sbr.rel (0) target = $region21
    $region20: #{ndp_forward.1} parent=1 // pred_region
      _
    $region21: #{ndp_forward.1} parent=1 // pred_fallthru
      _
    // Predicated region
    $region22: #{ndp_forward.1} parent=1 // pred_check
      _
    $region23: #{ndp_forward.1} parent=1 // pred_check_branch
      %386 = sbr.rel (0) target = $region25
    $region24: #{ndp_forward.1} parent=1 // pred_region
      _
    $region25: #{ndp_forward.1} parent=1 // pred_fallthru
      _
    %387 = vsyncpa [#allocation3], 1
    %388 = vsyncpa [#allocation5], 1

</llo_original>
